<compile_context>
chip_gen: v7x
topology: tpu7x:2x2x1
jax: 0.10.0
libtpu: 0.0.40
codegen_flags: <defaults>
</compile_context>

<pallas_src>
import functools

import jax
import jax.numpy as jnp
from jax.experimental import pallas as pl
from jax.experimental.pallas import tpu as pltpu


def prediction_head_kernel(hid_ref, w1_ref, b1_ref, w2_ref, b2_ref,
                           logits_ref, feat_ref, acc_ref, *, inv_s):
    # hid_ref: [TB, TS, D]   w1_ref: [D, Ep]   b1_ref: [1, Ep]
    # w2_ref:  [Ep, Op]      b2_ref: [1, Op]
    # logits_ref: [TB, Op]   feat_ref: [TB, Ep]   acc_ref (scratch): [TB, D] f32
    s = pl.program_id(1)

    @pl.when(s == 0)
    def _init():
        acc_ref[...] = jnp.zeros_like(acc_ref)

    # Streaming sequence-sum: hidden states arrive in native dtype, per-tile cast,
    # accumulate in f32.  (mean scale folded into the finalize step.)
    acc_ref[...] += jnp.sum(hid_ref[...].astype(jnp.float32), axis=1)

    @pl.when(s == pl.num_programs(1) - 1)
    def _finalize():
        pooled = acc_ref[...] * inv_s                                        # [TB, D]
        h = jnp.dot(pooled, w1_ref[...],
                    preferred_element_type=jnp.float32) + b1_ref[...]        # [TB, Ep]
        # dropout(p=0.2) -> identity (eval mode)
        # TODO(synk): training-mode stochastic dropout (pltpu.prng_*) not emitted here.
        feat = jnp.tanh(h)                                                   # [TB, Ep]
        logits = jnp.dot(feat, w2_ref[...],
                         preferred_element_type=jnp.float32) + b2_ref[...]   # [TB, Op]
        feat_ref[...] = feat.astype(feat_ref.dtype)
        logits_ref[...] = logits.astype(logits_ref.dtype)


def _round_up(x, m):
    return ((x + m - 1) // m) * m


def bert_prediction_head(hidden_states, w1, b1, w2, b2, *, tb=8, ts=512):
    """hidden_states: [B, S, D]; w1: [D, E]; w2: [E, O].

    Returns (logits [B, O] f32, feature [B, E] f32).
    """
    B, S, D = hidden_states.shape
    E = w1.shape[1]
    O = w2.shape[1]

    # Tile / padding choices: batch tile multiple of 8, seq tile multiple of 8,
    # output feature dims padded to 128 lanes (unmasked vst).
    TB = tb
    B_pad = _round_up(B, TB)
    TS = min(ts, _round_up(S, 8))
    S_pad = _round_up(S, TS)
    E_pad = _round_up(E, 128)
    O_pad = _round_up(O, 128)

    hid = hidden_states
    if (B_pad, S_pad) != (B, S):
        hid = jnp.pad(hid, ((0, B_pad - B), (0, S_pad - S), (0, 0)))
    w1_p = jnp.pad(w1, ((0, 0), (0, E_pad - E))) if E_pad != E else w1
    b1_p = jnp.pad(b1, (0, E_pad - E)).reshape(1, E_pad)
    w2_p = w2
    if (E_pad, O_pad) != (E, O):
        w2_p = jnp.pad(w2, ((0, E_pad - E), (0, O_pad - O)))
    b2_p = jnp.pad(b2, (0, O_pad - O)).reshape(1, O_pad)

    grid = (B_pad // TB, S_pad // TS)
    inv_s = 1.0 / float(S)  # mean over the ORIGINAL sequence length (pad rows are zero)

    kernel = functools.partial(prediction_head_kernel, inv_s=inv_s)

    itemsize = jnp.dtype(hid.dtype).itemsize
    w_itemsize = jnp.dtype(w1_p.dtype).itemsize
    cost = pl.CostEstimate(
        flops=int(B_pad * S_pad * D                      # pooled sum
                  + 2 * B_pad * D * E_pad                # lin1
                  + 2 * B_pad * E_pad * O_pad),          # lin2
        transcendentals=int(B_pad * E_pad),              # tanh
        bytes_accessed=int(B_pad * S_pad * D * itemsize
                           + (D * E_pad + E_pad * O_pad + E_pad + O_pad) * w_itemsize
                           + B_pad * (E_pad + O_pad) * 4),
    )

    logits_p, feat_p = pl.pallas_call(
        kernel,
        out_shape=(
            jax.ShapeDtypeStruct((B_pad, O_pad), jnp.float32),
            jax.ShapeDtypeStruct((B_pad, E_pad), jnp.float32),
        ),
        grid=grid,
        in_specs=[
            # streamed hidden-state tiles
            pl.BlockSpec((TB, TS, D), lambda b, s: (b, s, 0)),
            # resident weights / biases (constant index_map -> DMA'd once)
            pl.BlockSpec((D, E_pad), lambda b, s: (0, 0)),
            pl.BlockSpec((1, E_pad), lambda b, s: (0, 0)),
            pl.BlockSpec((E_pad, O_pad), lambda b, s: (0, 0)),
            pl.BlockSpec((1, O_pad), lambda b, s: (0, 0)),
        ],
        out_specs=(
            pl.BlockSpec((TB, O_pad), lambda b, s: (b, 0)),
            pl.BlockSpec((TB, E_pad), lambda b, s: (b, 0)),
        ),
        scratch_shapes=[pltpu.VMEM((TB, D), jnp.float32)],
        compiler_params=pltpu.CompilerParams(
            dimension_semantics=("parallel", "arbitrary"),
            vmem_limit_bytes=64 * 1024 * 1024,
        ),
        cost_estimate=cost,
    )(hid, w1_p, b1_p, w2_p, b2_p)

    return logits_p[:B, :O], feat_p[:B, :E]


def reference_head(hidden_states, w1, b1, w2, b2):
    pooled = jnp.mean(hidden_states.astype(jnp.float32), axis=1)
    feat = jnp.tanh(pooled @ w1 + b1)
    logits = feat @ w2 + b2
    return logits, feat


if __name__ == "__main__":
    # Small shapes consistent with the module (head applied to pooled BERT output).
    B, S, D = 2, 8, 32          # batch, seq_len, hidden dim
    E = 32                      # embedding_dim
    O = 16                      # out_feature

    key = jax.random.PRNGKey(0)
    k_hid, k_w1, k_b1, k_w2, k_b2 = jax.random.split(key, 5)

    # Synthetic "bert_model(...).hidden_states[-1]" output.
    hidden_states = jax.random.normal(k_hid, (B, S, D), dtype=jnp.float32)

    # Deterministic parameter init (nn.Linear-style uniform bounds).
    bound1 = 1.0 / (D ** 0.5)
    w1 = jax.random.uniform(k_w1, (D, E), jnp.float32, -bound1, bound1)
    b1 = jax.random.uniform(k_b1, (E,), jnp.float32, -bound1, bound1)
    bound2 = 1.0 / (E ** 0.5)
    w2 = jax.random.uniform(k_w2, (E, O), jnp.float32, -bound2, bound2)
    b2 = jax.random.uniform(k_b2, (O,), jnp.float32, -bound2, bound2)

    logits, feature = bert_prediction_head(hidden_states, w1, b1, w2, b2)
    jax.block_until_ready((logits, feature))

    ref_logits, ref_feature = reference_head(hidden_states, w1, b1, w2, b2)
    assert logits.shape == (B, O) and feature.shape == (B, E)
    assert jnp.allclose(logits, ref_logits, atol=1e-5, rtol=1e-5)
    assert jnp.allclose(feature, ref_feature, atol=1e-5, rtol=1e-5)

    print("KERNEL_OK")
</pallas_src>

<mosaic_0001>
module attributes {stable_mosaic.version = 11 : i64} {
  func.func @prediction_head_kernel(%arg0: i32, %arg1: i32, %arg2: memref<8x8x32xf32, #tpu.memory_space<vmem>>, %arg3: memref<32x128xf32, #tpu.memory_space<vmem>>, %arg4: memref<1x128xf32, #tpu.memory_space<vmem>>, %arg5: memref<128x128xf32, #tpu.memory_space<vmem>>, %arg6: memref<1x128xf32, #tpu.memory_space<vmem>>, %arg7: memref<8x128xf32, #tpu.memory_space<vmem>>, %arg8: memref<8x128xf32, #tpu.memory_space<vmem>>, %arg9: memref<8x32xf32, #tpu.memory_space<vmem>>) attributes {dimension_semantics = [#tpu.dimension_semantics<parallel>, #tpu.dimension_semantics<arbitrary>], iteration_bounds = array<i64: 1, 1>, scalar_prefetch = 0 : i64, scratch_operands = 1 : i64, tpu.core_type = #tpu.core_type<tc>, window_params = [{transform_indices = @transform_0, window_bounds = array<i64: 8, 8, 32>}, {pipeline_mode = #tpu.pipeline_mode<synchronous>, transform_indices = @transform_1, window_bounds = array<i64: 32, 128>}, {pipeline_mode = #tpu.pipeline_mode<synchronous>, transform_indices = @transform_2, window_bounds = array<i64: 1, 128>}, {pipeline_mode = #tpu.pipeline_mode<synchronous>, transform_indices = @transform_3, window_bounds = array<i64: 128, 128>}, {pipeline_mode = #tpu.pipeline_mode<synchronous>, transform_indices = @transform_4, window_bounds = array<i64: 1, 128>}, {transform_indices = @transform_5, window_bounds = array<i64: 8, 128>}, {transform_indices = @transform_6, window_bounds = array<i64: 8, 128>}]} {
    %c0_i32 = arith.constant 0 : i32
    %0 = arith.cmpi eq, %arg1, %c0_i32 : i32
    %1 = arith.extui %0 : i1 to i32
    %c0_i32_0 = arith.constant 0 : i32
    %2 = arith.cmpi ne, %1, %c0_i32_0 : i32
    scf.if %2 {
      %cst_9 = arith.constant 0.000000e+00 : f32
      %11 = vector.broadcast %cst_9 : f32 to vector<8x32xf32>
      %c0_10 = arith.constant 0 : index
      %c0_11 = arith.constant 0 : index
      %12 = vector.load %arg9[%c0_10, %c0_11] : memref<8x32xf32, #tpu.memory_space<vmem>>, vector<8x32xf32>
      tpu.vector_store %arg9[%c0_10, %c0_11], %11 {strides = array<i32>} : memref<8x32xf32, #tpu.memory_space<vmem>>, vector<8x32xf32>,
    } else {
    }
    %c0 = arith.constant 0 : index
    %c0_1 = arith.constant 0 : index
    %3 = vector.load %arg9[%c0, %c0_1] : memref<8x32xf32, #tpu.memory_space<vmem>>, vector<8x32xf32>
    %c0_2 = arith.constant 0 : index
    %c0_3 = arith.constant 0 : index
    %c0_4 = arith.constant 0 : index
    %4 = vector.load %arg2[%c0_2, %c0_3, %c0_4] : memref<8x8x32xf32, #tpu.memory_space<vmem>>, vector<8x8x32xf32>
    %cst = arith.constant dense<0.000000e+00> : vector<8x32xf32>
    %5 = vector.multi_reduction <add>, %4, %cst [1] : vector<8x8x32xf32> to vector<8x32xf32>
    %6 = arith.addf %3, %5 : vector<8x32xf32>
    %c0_5 = arith.constant 0 : index
    %c0_6 = arith.constant 0 : index
    %7 = vector.load %arg9[%c0_5, %c0_6] : memref<8x32xf32, #tpu.memory_space<vmem>>, vector<8x32xf32>
    tpu.vector_store %arg9[%c0_5, %c0_6], %6 {strides = array<i32>} : memref<8x32xf32, #tpu.memory_space<vmem>>, vector<8x32xf32>,
    %c0_i32_7 = arith.constant 0 : i32
    %8 = arith.cmpi eq, %arg1, %c0_i32_7 : i32
    %9 = arith.extui %8 : i1 to i32
    %c0_i32_8 = arith.constant 0 : i32
    %10 = arith.cmpi ne, %9, %c0_i32_8 : i32
    scf.if %10 {
      %c0_9 = arith.constant 0 : index
      %c0_10 = arith.constant 0 : index
      %11 = vector.load %arg9[%c0_9, %c0_10] : memref<8x32xf32, #tpu.memory_space<vmem>>, vector<8x32xf32>
      %cst_11 = arith.constant 1.250000e-01 : f32
      %12 = vector.broadcast %cst_11 : f32 to vector<8x32xf32>
      %13 = arith.mulf %11, %12 : vector<8x32xf32>
      %c0_12 = arith.constant 0 : index
      %c0_13 = arith.constant 0 : index
      %14 = vector.load %arg3[%c0_12, %c0_13] : memref<32x128xf32, #tpu.memory_space<vmem>>, vector<32x128xf32>
      %cst_14 = arith.constant dense<0.000000e+00> : vector<8x128xf32>
      %15 = tpu.matmul %13, %14, %cst_14 {dimension_numbers = #tpu.dot_dimension_numbers<[1], [0], [0], [1], [0, 0, 1, 1], [], []>} : vector<8x32xf32>, vector<32x128xf32>, vector<8x128xf32> -> vector<8x128xf32>
      %c0_15 = arith.constant 0 : index
      %c0_16 = arith.constant 0 : index
      %16 = vector.load %arg4[%c0_15, %c0_16] : memref<1x128xf32, #tpu.memory_space<vmem>>, vector<1x128xf32>
      %17 = vector.broadcast %16 : vector<1x128xf32> to vector<8x128xf32>
      %18 = arith.addf %15, %17 : vector<8x128xf32>
      %19 = math.tanh %18 : vector<8x128xf32>
      %c0_17 = arith.constant 0 : index
      %c0_18 = arith.constant 0 : index
      %20 = vector.load %arg5[%c0_17, %c0_18] : memref<128x128xf32, #tpu.memory_space<vmem>>, vector<128x128xf32>
      %cst_19 = arith.constant dense<0.000000e+00> : vector<8x128xf32>
      %21 = tpu.matmul %19, %20, %cst_19 {dimension_numbers = #tpu.dot_dimension_numbers<[1], [0], [0], [1], [0, 0, 1, 1], [], []>} : vector<8x128xf32>, vector<128x128xf32>, vector<8x128xf32> -> vector<8x128xf32>
      %c0_20 = arith.constant 0 : index
      %c0_21 = arith.constant 0 : index
      %22 = vector.load %arg6[%c0_20, %c0_21] : memref<1x128xf32, #tpu.memory_space<vmem>>, vector<1x128xf32>
      %23 = vector.broadcast %22 : vector<1x128xf32> to vector<8x128xf32>
      %24 = arith.addf %21, %23 : vector<8x128xf32>
      %c0_22 = arith.constant 0 : index
      %c0_23 = arith.constant 0 : index
      %25 = vector.load %arg8[%c0_22, %c0_23] : memref<8x128xf32, #tpu.memory_space<vmem>>, vector<8x128xf32>
      tpu.vector_store %arg8[%c0_22, %c0_23], %19 {strides = array<i32>} : memref<8x128xf32, #tpu.memory_space<vmem>>, vector<8x128xf32>,
      %c0_24 = arith.constant 0 : index
      %c0_25 = arith.constant 0 : index
      %26 = vector.load %arg7[%c0_24, %c0_25] : memref<8x128xf32, #tpu.memory_space<vmem>>, vector<8x128xf32>
      tpu.vector_store %arg7[%c0_24, %c0_25], %24 {strides = array<i32>} : memref<8x128xf32, #tpu.memory_space<vmem>>, vector<8x128xf32>,
    } else {
    }
    return
  }
  func.func @transform_0(%arg0: i32, %arg1: i32) -> (i32, i32, i32) {
    %c0_i32 = arith.constant 0 : i32
    %c0_i32_0 = arith.constant 0 : i32
    return %arg0, %arg1, %c0_i32 : i32, i32, i32
  }
  func.func @transform_1(%arg0: i32, %arg1: i32) -> (i32, i32) {
    %c0_i32 = arith.constant 0 : i32
    %c0_i32_0 = arith.constant 0 : i32
    %c0_i32_1 = arith.constant 0 : i32
    return %c0_i32, %c0_i32_0 : i32, i32
  }
  func.func @transform_2(%arg0: i32, %arg1: i32) -> (i32, i32) {
    %c0_i32 = arith.constant 0 : i32
    %c0_i32_0 = arith.constant 0 : i32
    %c0_i32_1 = arith.constant 0 : i32
    return %c0_i32, %c0_i32_0 : i32, i32
  }
  func.func @transform_3(%arg0: i32, %arg1: i32) -> (i32, i32) {
    %c0_i32 = arith.constant 0 : i32
    %c0_i32_0 = arith.constant 0 : i32
    %c0_i32_1 = arith.constant 0 : i32
    return %c0_i32, %c0_i32_0 : i32, i32
  }
  func.func @transform_4(%arg0: i32, %arg1: i32) -> (i32, i32) {
    %c0_i32 = arith.constant 0 : i32
    %c0_i32_0 = arith.constant 0 : i32
    %c0_i32_1 = arith.constant 0 : i32
    return %c0_i32, %c0_i32_0 : i32, i32
  }
  func.func @transform_5(%arg0: i32, %arg1: i32) -> (i32, i32) {
    %c0_i32 = arith.constant 0 : i32
    %c0_i32_0 = arith.constant 0 : i32
    return %arg0, %c0_i32 : i32, i32
  }
  func.func @transform_6(%arg0: i32, %arg1: i32) -> (i32, i32) {
    %c0_i32 = arith.constant 0 : i32
    %c0_i32_0 = arith.constant 0 : i32
    return %arg0, %c0_i32 : i32, i32
  }
}

</mosaic_0001>

<llo_original>
// kernel: tpu_custom_call.1
$region0: #{tpu_custom_call.1}
  #allocation0 [shape = 'u32[]', space=smem, size = 0x4, offset = 0x4, fixed_abs, tag = 'smem constant byte address 0x4 - core index']
  #allocation1 [shape = 'u32[144,128]{1,0:T(1,128)}', space=vmem, size = 0x12000, scoped, tag = 'internal scratch']
  #allocation2 [shape = 'f32[8,32]{1,0:T(8,128)}', space=vmem, size = 0x1000, scoped, tag = 'scratch operand']
  %s0 = inlined_call_operand.hbm [shape: f32[8,8,32], index: 0, kind: input, shape index: {}]
  %s1 = inlined_call_operand.hbm [shape: f32[32,128], index: 1, kind: input, shape index: {}]
  %s2 = inlined_call_operand.hbm [shape: f32[1,128], index: 2, kind: input, shape index: {}]
  %s3 = inlined_call_operand.hbm [shape: f32[128,128], index: 3, kind: input, shape index: {}]
  %s4 = inlined_call_operand.hbm [shape: f32[1,128], index: 4, kind: input, shape index: {}]
  %s5 = inlined_call_operand.hbm [shape: f32[8,128], index: 5, kind: output, shape index: {0}]
  %s6 = inlined_call_operand.hbm [shape: f32[8,128], index: 6, kind: output, shape index: {1}]
  %7 = xla_tuple %s5, %s6
  %s8 = sld [smem:[#allocation0]]
  $region66: #{tpu_custom_call.1} parent=0
    _
  %s10 = ssub.s32 1, %s8
  %s11 = scalar_select 0, %s10, %s8
  $region1: #{tpu_custom_call.1} parent=0
    #allocation3 [shape = 'u8[32768]{0}', space=vmem, size = 0x8000, scoped, tag = 'input window, operand 0, single buffered']
    #allocation4 [shape = 's32[1]{0}', space=sflag, size = 0x4, scoped, tag = 'scoped memory for tpu_custom_call.1']
    #allocation5 [shape = 's32[1]{0}', space=sflag, size = 0x4, scoped, tag = 'scoped memory for tpu_custom_call.1']
    #allocation6 [shape = 'u8[16384]{0}', space=vmem, size = 0x4000, scoped, tag = 'input window, operand 1, single buffered']
    #allocation7 [shape = 's32[1]{0}', space=sflag, size = 0x4, scoped, tag = 'scoped memory for tpu_custom_call.1']
    #allocation8 [shape = 'u8[512]{0}', space=vmem, size = 0x400, scoped, tag = 'input window, operand 2, single buffered']
    #allocation9 [shape = 'u8[65536]{0}', space=vmem, size = 0x10000, scoped, tag = 'input window, operand 3, single buffered']
    #allocation10 [shape = 's32[1]{0}', space=sflag, size = 0x4, scoped, tag = 'scoped memory for tpu_custom_call.1']
    #allocation11 [shape = 'u8[512]{0}', space=vmem, size = 0x400, scoped, tag = 'input window, operand 4, single buffered']
    #allocation12 [shape = 'u8[4096]{0}', space=vmem, size = 0x1000, scoped, tag = 'output window, operand 0, single buffered']
    #allocation13 [shape = 'u8[4096]{0}', space=vmem, size = 0x1000, scoped, tag = 'output window, operand 1, single buffered']
    #allocation14 [shape = 's32[1]{0}', space=sflag, size = 0x4, scoped, tag = 'scoped memory for tpu_custom_call.1']
    %12 = vsyncpa [#allocation4], 0
    %13 = vsyncpa [#allocation7], 0
    %14 = vsyncpa [#allocation10], 0
    %15 = vsyncpa [#allocation5], 0
    %16 = vsyncpa [#allocation14], 0
    // Predicated region
    $region2: #{tpu_custom_call.1} parent=1 // pred_check
      _
    $region3: #{tpu_custom_call.1} parent=1 // pred_check_branch
      %18 = sbr.rel (0) target = $region5
    $region4: #{tpu_custom_call.1} parent=1 // pred_region
      %s20 = ssub.s32 1024, 1024
      %21 = vsyncadd [#allocation4], %s20
      %s22 = sshll.u32 [#allocation3], 4
      %s23 = int_to_ptr.vmem [resolvable:$true] %s22
      %28 = dma.hbm_to_vmem [thread:$0]  %s0, 1024, %s23, [#allocation4], 128, 128, 8
    $region5: #{tpu_custom_call.1} parent=1 // pred_fallthru
      _
    // Predicated region
    $region6: #{tpu_custom_call.1} parent=1 // pred_check
      _
    $region7: #{tpu_custom_call.1} parent=1 // pred_check_branch
      %30 = sbr.rel (0) target = $region9
    $region8: #{tpu_custom_call.1} parent=1 // pred_region
      %s32 = ssub.s32 512, 512
      %33 = vsyncadd [#allocation7], %s32
      %s34 = sshll.u32 [#allocation6], 4
      %s35 = int_to_ptr.vmem [resolvable:$true] %s34
      %40 = dma.hbm_to_vmem [thread:$0]  %s1, 512, %s35, [#allocation7], 128, 128, 8
    $region9: #{tpu_custom_call.1} parent=1 // pred_fallthru
      _
    // Predicated region
    $region10: #{tpu_custom_call.1} parent=1 // pred_check
      _
    $region11: #{tpu_custom_call.1} parent=1 // pred_check_branch
      %42 = sbr.rel (0) target = $region13
    $region12: #{tpu_custom_call.1} parent=1 // pred_region
      %s44 = ssub.s32 16, 16
      %45 = vsyncadd [#allocation7], %s44
      %s47 = sshll.u32 [#allocation8], 4
      %s48 = int_to_ptr.vmem [resolvable:$true] %s47
      %50 = dma.hbm_to_vmem [thread:$0]  %s2, 16, %s48, [#allocation7]
    $region13: #{tpu_custom_call.1} parent=1 // pred_fallthru
      _
    // Predicated region
    $region14: #{tpu_custom_call.1} parent=1 // pred_check
      _
    $region15: #{tpu_custom_call.1} parent=1 // pred_check_branch
      %52 = sbr.rel (0) target = $region17
    $region16: #{tpu_custom_call.1} parent=1 // pred_region
      %s54 = ssub.s32 2048, 2048
      %55 = vsyncadd [#allocation10], %s54
      %s56 = sshll.u32 [#allocation9], 4
      %s57 = int_to_ptr.vmem [resolvable:$true] %s56
      %62 = dma.hbm_to_vmem [thread:$0]  %s3, 2048, %s57, [#allocation10], 128, 128, 8
    $region17: #{tpu_custom_call.1} parent=1 // pred_fallthru
      _
    // Predicated region
    $region18: #{tpu_custom_call.1} parent=1 // pred_check
      _
    $region19: #{tpu_custom_call.1} parent=1 // pred_check_branch
      %64 = sbr.rel (0) target = $region21
    $region20: #{tpu_custom_call.1} parent=1 // pred_region
      %s66 = ssub.s32 16, 16
      %67 = vsyncadd [#allocation10], %s66
      %s69 = sshll.u32 [#allocation11], 4
      %s70 = int_to_ptr.vmem [resolvable:$true] %s69
      %72 = dma.hbm_to_vmem [thread:$0]  %s4, 16, %s70, [#allocation10]
    $region21: #{tpu_custom_call.1} parent=1 // pred_fallthru
      _
    // Predicated region
    $region22: #{tpu_custom_call.1} parent=1 // pred_check
      _
    $region23: #{tpu_custom_call.1} parent=1 // pred_check_branch
      %74 = sbr.rel (0) target = $region25
    $region24: #{tpu_custom_call.1} parent=1 // pred_region
      %75 = dma.done [#allocation4], 1024
    $region25: #{tpu_custom_call.1} parent=1 // pred_fallthru
      _
    // Predicated region
    $region26: #{tpu_custom_call.1} parent=1 // pred_check
      _
    $region27: #{tpu_custom_call.1} parent=1 // pred_check_branch
      %77 = sbr.rel (0) target = $region29
    $region28: #{tpu_custom_call.1} parent=1 // pred_region
      %78 = dma.done [#allocation7], 512
    $region29: #{tpu_custom_call.1} parent=1 // pred_fallthru
      _
    // Predicated region
    $region30: #{tpu_custom_call.1} parent=1 // pred_check
      _
    $region31: #{tpu_custom_call.1} parent=1 // pred_check_branch
      %80 = sbr.rel (0) target = $region33
    $region32: #{tpu_custom_call.1} parent=1 // pred_region
      %81 = dma.done [#allocation7], 16
    $region33: #{tpu_custom_call.1} parent=1 // pred_fallthru
      _
    // Predicated region
    $region34: #{tpu_custom_call.1} parent=1 // pred_check
      _
    $region35: #{tpu_custom_call.1} parent=1 // pred_check_branch
      %83 = sbr.rel (0) target = $region37
    $region36: #{tpu_custom_call.1} parent=1 // pred_region
      %84 = dma.done [#allocation10], 2048
    $region37: #{tpu_custom_call.1} parent=1 // pred_fallthru
      _
    // Predicated region
    $region38: #{tpu_custom_call.1} parent=1 // pred_check
      _
    $region39: #{tpu_custom_call.1} parent=1 // pred_check_branch
      %86 = sbr.rel (0) target = $region41
    $region40: #{tpu_custom_call.1} parent=1 // pred_region
      %87 = dma.done [#allocation10], 16
    $region41: #{tpu_custom_call.1} parent=1 // pred_fallthru
      _
    %p88 = scmp.eq.s32.totalorder 0, 0
    // Predicated region
    $region42: #{tpu_custom_call.1} parent=1 // pred_check
      %p89 = pneg %p88
    $region43: #{tpu_custom_call.1} parent=1 // pred_check_branch
      %91 = sbr.rel (%p89) target = $region45
    $region44: #{tpu_custom_call.1} parent=1 // pred_region
      %vm92 = vcmask 261120
      %93 = vst.msk [vmem:[#allocation2] sm:$0xff] %vm92, 0.0
    $region45: #{tpu_custom_call.1} parent=1 // pred_fallthru
      _
    %v94 = vld [vmem:[#allocation2] sm:$0xff]
    %v95 = vld [vmem:[#allocation3] sm:$0xff]
    %v96 = vld [vmem:[#allocation3 + $0x8] sm:$0xff]
    %v97 = vld [vmem:[#allocation3 + $0x10] sm:$0xff]
    %v98 = vld [vmem:[#allocation3 + $0x18] sm:$0xff]
    %v99 = vld [vmem:[#allocation3 + $0x20] sm:$0xff]
    %v100 = vld [vmem:[#allocation3 + $0x28] sm:$0xff]
    %v101 = vld [vmem:[#allocation3 + $0x30] sm:$0xff]
    %v102 = vld [vmem:[#allocation3 + $0x38] sm:$0xff]
    %vm103 = vcmask 261120
    %v104 = vsel %vm103, %v95, 0.0
    %v105 = vrot.slane %v104, 4
    %v106 = vadd.f32 %v104, %v105
    %v107 = vrot.slane %v106, 2
    %v108 = vadd.f32 %v106, %v107
    %v109 = vrot.slane %v108, 1
    %v110 = vadd.f32 %v108, %v109
    %v111 = vsel %vm103, %v96, 0.0
    %v112 = vrot.slane %v111, 4
    %v113 = vadd.f32 %v111, %v112
    %v114 = vrot.slane %v113, 2
    %v115 = vadd.f32 %v113, %v114
    %v116 = vrot.slane %v115, 1
    %v117 = vadd.f32 %v115, %v116
    %v118 = vsel %vm103, %v97, 0.0
    %v119 = vrot.slane %v118, 4
    %v120 = vadd.f32 %v118, %v119
    %v121 = vrot.slane %v120, 2
    %v122 = vadd.f32 %v120, %v121
    %v123 = vrot.slane %v122, 1
    %v124 = vadd.f32 %v122, %v123
    %v125 = vsel %vm103, %v98, 0.0
    %v126 = vrot.slane %v125, 4
    %v127 = vadd.f32 %v125, %v126
    %v128 = vrot.slane %v127, 2
    %v129 = vadd.f32 %v127, %v128
    %v130 = vrot.slane %v129, 1
    %v131 = vadd.f32 %v129, %v130
    %v132 = vsel %vm103, %v99, 0.0
    %v133 = vrot.slane %v132, 4
    %v134 = vadd.f32 %v132, %v133
    %v135 = vrot.slane %v134, 2
    %v136 = vadd.f32 %v134, %v135
    %v137 = vrot.slane %v136, 1
    %v138 = vadd.f32 %v136, %v137
    %v139 = vsel %vm103, %v100, 0.0
    %v140 = vrot.slane %v139, 4
    %v141 = vadd.f32 %v139, %v140
    %v142 = vrot.slane %v141, 2
    %v143 = vadd.f32 %v141, %v142
    %v144 = vrot.slane %v143, 1
    %v145 = vadd.f32 %v143, %v144
    %v146 = vsel %vm103, %v101, 0.0
    %v147 = vrot.slane %v146, 4
    %v148 = vadd.f32 %v146, %v147
    %v149 = vrot.slane %v148, 2
    %v150 = vadd.f32 %v148, %v149
    %v151 = vrot.slane %v150, 1
    %v152 = vadd.f32 %v150, %v151
    %v153 = vsel %vm103, %v102, 0.0
    %v154 = vrot.slane %v153, 4
    %v155 = vadd.f32 %v153, %v154
    %v156 = vrot.slane %v155, 2
    %v157 = vadd.f32 %v155, %v156
    %v158 = vrot.slane %v157, 1
    %v159 = vadd.f32 %v157, %v158
    %vm168 = vcmask 1041409
    %v169 = vsel %vm168, %v117, %v110
    %vm170 = vcmask 1042434
    %v171 = vsel %vm170, %v124, %v169
    %vm172 = vcmask 1043459
    %v173 = vsel %vm172, %v131, %v171
    %vm174 = vcmask 1044484
    %v175 = vsel %vm174, %v138, %v173
    %vm176 = vcmask 1045509
    %v177 = vsel %vm176, %v145, %v175
    %vm178 = vcmask 1046534
    %v179 = vsel %vm178, %v152, %v177
    %vm180 = vcmask 1047559
    %v181 = vsel %vm180, %v159, %v179
    %v183 = vadd.f32 %v94, %v181
    %184 = vst.msk [vmem:[#allocation2] sm:$0xff] %vm103, %v183
    // Predicated region
    $region46: #{tpu_custom_call.1} parent=1 // pred_check
      %p185 = pneg %p88
    $region47: #{tpu_custom_call.1} parent=1 // pred_check_branch
      %187 = sbr.rel (%p185) target = $region49
    $region48: #{tpu_custom_call.1} parent=1 // pred_region
      %v188 = vld [vmem:[#allocation2] sm:$0xff]
      %v189 = vmul.f32 %v188, 0.125
      %v190 = vld [vmem:[#allocation6] sm:$0xff]
      %v191 = vld [vmem:[#allocation6 + $0x8] sm:$0xff]
      %v192 = vld [vmem:[#allocation6 + $0x10] sm:$0xff]
      %v193 = vld [vmem:[#allocation6 + $0x18] sm:$0xff]
      %v194 = vld [vmem:[#allocation8] sm:$0x1]
      %v196 = vlaneseq
      %v197 = vshrl.u32 %v196, 7
      %v198 = vsub.s32 0, %v197
      %v199 = vrot.slane %v194, %v198
      %v202 = vsel %vm103, %v189, 0
      %204 = vmatprep.subr.mxu0 0.0
      %205 = vmatpush1.msra.mxu0 %v190
      %206 = vmatprep.subr.mxu0 0.0
      %207 = vmatpush1.msra.mxu0 %v191
      %208 = vmatprep.subr.mxu0 0.0
      %209 = vmatpush1.msra.mxu0 %v192
      %210 = vmatprep.subr.mxu0 0.0
      %211 = vmatpush1.msra.mxu0 %v193
      %212 = vmatprep.subr.mxu0 0.0
      %213 = vmatpush1.msra.mxu0 0.0
      %214 = vmatprep.subr.mxu0 0.0
      %215 = vmatpush1.msra.mxu0 0.0
      %216 = vmatprep.subr.mxu0 0.0
      %217 = vmatpush1.msra.mxu0 0.0
      %218 = vmatprep.subr.mxu0 0.0
      %219 = vmatpush1.msra.mxu0 0.0
      %220 = vmatprep.subr.mxu0 0.0
      %221 = vmatpush1.msra.mxu0 0.0
      %222 = vmatprep.subr.mxu0 0.0
      %223 = vmatpush1.msra.mxu0 0.0
      %224 = vmatprep.subr.mxu0 0.0
      %225 = vmatpush1.msra.mxu0 0.0
      %226 = vmatprep.subr.mxu0 0.0
      %227 = vmatpush1.msra.mxu0 0.0
      %228 = vmatprep.subr.mxu0 0.0
      %229 = vmatpush1.msra.mxu0 0.0
      %230 = vmatprep.subr.mxu0 0.0
      %231 = vmatpush1.msra.mxu0 0.0
      %232 = vmatprep.subr.mxu0 0.0
      %233 = vmatpush1.msra.mxu0 0.0
      %234 = vmatprep.subr.mxu0 0.0
      %235 = vmatpush1.msra.mxu0 0.0
      %236 = vmatprep.subr.mxu0 0.0
      %237 = vmatpush1.msra.mxu0 0.0
      %238 = vmatprep.subr.mxu0 0.0
      %239 = vmatpush1.msra.mxu0 0.0
      %240 = vmatprep.subr.mxu0 0.0
      %241 = vmatpush1.msra.mxu0 0.0
      %242 = vmatprep.subr.mxu0 0.0
      %243 = vmatpush1.msra.mxu0 0.0
      %244 = vmatprep.subr.mxu0 0.0
      %245 = vmatpush1.msra.mxu0 0.0
      %246 = vmatprep.subr.mxu0 0.0
      %247 = vmatpush1.msra.mxu0 0.0
      %248 = vmatprep.subr.mxu0 0.0
      %249 = vmatpush1.msra.mxu0 0.0
      %250 = vmatprep.subr.mxu0 0.0
      %251 = vmatpush1.msra.mxu0 0.0
      %252 = vmatprep.subr.mxu0 0.0
      %253 = vmatpush1.msra.mxu0 0.0
      %254 = vmatprep.subr.mxu0 0.0
      %255 = vmatpush1.msra.mxu0 0.0
      %256 = vmatprep.subr.mxu0 0.0
      %257 = vmatpush1.msra.mxu0 0.0
      %258 = vmatprep.subr.mxu0 0.0
      %259 = vmatpush1.msra.mxu0 0.0
      %260 = vmatprep.subr.mxu0 0.0
      %261 = vmatpush1.msra.mxu0 0.0
      %262 = vmatprep.subr.mxu0 0.0
      %263 = vmatpush1.msra.mxu0 0.0
      %264 = vmatprep.subr.mxu0 0.0
      %265 = vmatpush1.msra.mxu0 0.0
      %266 = vmatprep.subr.mxu0 0.0
      %267 = vmatpush1.msra.mxu0 0.0
      %268 = vmatprep.mubr.f32.mxu0 0.0
      %269 = vmatmul.mubr.f32.gmra.mrb[0].mxu0 %v202
      %v270 = vpop.f32.mrb[0].mxu0
      %v271 = vadd.f32 %v199, %v270
      %v272 = vpop.f32.mrb[0].mxu0
      %273 = vdwg.mxu0
      %v274 = vtanh.pop %v271
      %v275 = vld [vmem:[#allocation9] sm:$0xff]
      %v276 = vld [vmem:[#allocation9 + $0x8] sm:$0xff]
      %v277 = vld [vmem:[#allocation9 + $0x10] sm:$0xff]
      %v278 = vld [vmem:[#allocation9 + $0x18] sm:$0xff]
      %v279 = vld [vmem:[#allocation9 + $0x20] sm:$0xff]
      %v280 = vld [vmem:[#allocation9 + $0x28] sm:$0xff]
      %v281 = vld [vmem:[#allocation9 + $0x30] sm:$0xff]
      %v282 = vld [vmem:[#allocation9 + $0x38] sm:$0xff]
      %v283 = vld [vmem:[#allocation9 + $0x40] sm:$0xff]
      %v284 = vld [vmem:[#allocation9 + $0x48] sm:$0xff]
      %v285 = vld [vmem:[#allocation9 + $0x50] sm:$0xff]
      %v286 = vld [vmem:[#allocation9 + $0x58] sm:$0xff]
      %v287 = vld [vmem:[#allocation9 + $0x60] sm:$0xff]
      %v288 = vld [vmem:[#allocation9 + $0x68] sm:$0xff]
      %v289 = vld [vmem:[#allocation9 + $0x70] sm:$0xff]
      %v290 = vld [vmem:[#allocation9 + $0x78] sm:$0xff]
      %v291 = vld [vmem:[#allocation11] sm:$0x1]
      %v293 = vlaneseq
      %v294 = vshrl.u32 %v293, 7
      %v295 = vsub.s32 0, %v294
      %v296 = vrot.slane %v291, %v295
      %298 = vmatprep.subr.mxu0 0.0
      %299 = vmatpush1.msra.mxu0 %v275
      %300 = vmatprep.subr.mxu0 0.0
      %301 = vmatpush1.msra.mxu0 %v276
      %302 = vmatprep.subr.mxu0 0.0
      %303 = vmatpush1.msra.mxu0 %v277
      %304 = vmatprep.subr.mxu0 0.0
      %305 = vmatpush1.msra.mxu0 %v278
      %306 = vmatprep.subr.mxu0 0.0
      %307 = vmatpush1.msra.mxu0 %v279
      %308 = vmatprep.subr.mxu0 0.0
      %309 = vmatpush1.msra.mxu0 %v280
      %310 = vmatprep.subr.mxu0 0.0
      %311 = vmatpush1.msra.mxu0 %v281
      %312 = vmatprep.subr.mxu0 0.0
      %313 = vmatpush1.msra.mxu0 %v282
      %314 = vmatprep.subr.mxu0 0.0
      %315 = vmatpush1.msra.mxu0 %v283
      %316 = vmatprep.subr.mxu0 0.0
      %317 = vmatpush1.msra.mxu0 %v284
      %318 = vmatprep.subr.mxu0 0.0
      %319 = vmatpush1.msra.mxu0 %v285
      %320 = vmatprep.subr.mxu0 0.0
      %321 = vmatpush1.msra.mxu0 %v286
      %322 = vmatprep.subr.mxu0 0.0
      %323 = vmatpush1.msra.mxu0 %v287
      %324 = vmatprep.subr.mxu0 0.0
      %325 = vmatpush1.msra.mxu0 %v288
      %326 = vmatprep.subr.mxu0 0.0
      %327 = vmatpush1.msra.mxu0 %v289
      %328 = vmatprep.subr.mxu0 0.0
      %329 = vmatpush1.msra.mxu0 %v290
      %330 = vmatprep.subr.mxu0 0.0
      %331 = vmatpush1.msra.mxu0 0.0
      %332 = vmatprep.subr.mxu0 0.0
      %333 = vmatpush1.msra.mxu0 0.0
      %334 = vmatprep.subr.mxu0 0.0
      %335 = vmatpush1.msra.mxu0 0.0
      %336 = vmatprep.subr.mxu0 0.0
      %337 = vmatpush1.msra.mxu0 0.0
      %338 = vmatprep.subr.mxu0 0.0
      %339 = vmatpush1.msra.mxu0 0.0
      %340 = vmatprep.subr.mxu0 0.0
      %341 = vmatpush1.msra.mxu0 0.0
      %342 = vmatprep.subr.mxu0 0.0
      %343 = vmatpush1.msra.mxu0 0.0
      %344 = vmatprep.subr.mxu0 0.0
      %345 = vmatpush1.msra.mxu0 0.0
      %346 = vmatprep.subr.mxu0 0.0
      %347 = vmatpush1.msra.mxu0 0.0
      %348 = vmatprep.subr.mxu0 0.0
      %349 = vmatpush1.msra.mxu0 0.0
      %350 = vmatprep.subr.mxu0 0.0
      %351 = vmatpush1.msra.mxu0 0.0
      %352 = vmatprep.subr.mxu0 0.0
      %353 = vmatpush1.msra.mxu0 0.0
      %354 = vmatprep.subr.mxu0 0.0
      %355 = vmatpush1.msra.mxu0 0.0
      %356 = vmatprep.subr.mxu0 0.0
      %357 = vmatpush1.msra.mxu0 0.0
      %358 = vmatprep.subr.mxu0 0.0
      %359 = vmatpush1.msra.mxu0 0.0
      %360 = vmatprep.subr.mxu0 0.0
      %361 = vmatpush1.msra.mxu0 0.0
      %362 = vmatprep.mubr.f32.mxu0 0.0
      %363 = vmatmul.mubr.f32.gmra.mrb[0].mxu0 %v274
      %v364 = vpop.f32.mrb[0].mxu0
      %v365 = vadd.f32 %v296, %v364
      %v366 = vpop.f32.mrb[0].mxu0
      %367 = vdwg.mxu0
      %368 = vst [vmem:[#allocation13] sm:$0xff] %v274
      %369 = vst [vmem:[#allocation12] sm:$0xff] %v365
    $region49: #{tpu_custom_call.1} parent=1 // pred_fallthru
      _
    // Predicated region
    $region50: #{tpu_custom_call.1} parent=1 // pred_check
      _
    $region51: #{tpu_custom_call.1} parent=1 // pred_check_branch
      %371 = sbr.rel (0) target = $region53
    $region52: #{tpu_custom_call.1} parent=1 // pred_region
      %s373 = ssub.s32 128, 128
      %374 = vsyncadd [#allocation5], %s373
      %s376 = sshll.u32 [#allocation12], 4
      %s377 = int_to_ptr.vmem [resolvable:$true] %s376
      %379 = dma.vmem_to_hbm [thread:$0]  %s377, 128, %s5, [#allocation5]
    $region53: #{tpu_custom_call.1} parent=1 // pred_fallthru
      _
    // Predicated region
    $region54: #{tpu_custom_call.1} parent=1 // pred_check
      _
    $region55: #{tpu_custom_call.1} parent=1 // pred_check_branch
      %381 = sbr.rel (0) target = $region57
    $region56: #{tpu_custom_call.1} parent=1 // pred_region
      %s383 = ssub.s32 128, 128
      %384 = vsyncadd [#allocation14], %s383
      %s386 = sshll.u32 [#allocation13], 4
      %s387 = int_to_ptr.vmem [resolvable:$true] %s386
      %389 = dma.vmem_to_hbm [thread:$0]  %s387, 128, %s6, [#allocation14]
    $region57: #{tpu_custom_call.1} parent=1 // pred_fallthru
      _
    // Predicated region
    $region58: #{tpu_custom_call.1} parent=1 // pred_check
      _
    $region59: #{tpu_custom_call.1} parent=1 // pred_check_branch
      %391 = sbr.rel (0) target = $region61
    $region60: #{tpu_custom_call.1} parent=1 // pred_region
      %392 = dma.done [#allocation5], 128
    $region61: #{tpu_custom_call.1} parent=1 // pred_fallthru
      _
    // Predicated region
    $region62: #{tpu_custom_call.1} parent=1 // pred_check
      _
    $region63: #{tpu_custom_call.1} parent=1 // pred_check_branch
      %394 = sbr.rel (0) target = $region65
    $region64: #{tpu_custom_call.1} parent=1 // pred_region
      %395 = dma.done [#allocation14], 128
    $region65: #{tpu_custom_call.1} parent=1 // pred_fallthru
      _
    %396 = vsyncpa [#allocation4], 1
    %397 = vsyncpa [#allocation7], 1
    %398 = vsyncpa [#allocation10], 1
    %399 = vsyncpa [#allocation5], 1
    %400 = vsyncpa [#allocation14], 1

</llo_original>
